<compile_context>
chip_gen: v7x
topology: tpu7x:2x2x1
jax: 0.10.0
libtpu: 0.0.40
codegen_flags: <defaults>
</compile_context>

<pallas_src>
import math
import functools

import jax
import jax.numpy as jnp
from jax.experimental import pallas as pl
from jax.experimental.pallas import tpu as pltpu


# ----------------------------------------------------------------------------
# Linear projection kernel (row-tiled, software pipelined)
# ----------------------------------------------------------------------------

def _linear_kernel(x_ref, w_ref, b_ref, o_ref):
    # x: (TM, Ein), w: (Ein, Eout), b: (1, Eout)
    o_ref[...] = (
        jnp.dot(x_ref[...], w_ref[...], preferred_element_type=jnp.float32)
        + b_ref[...]
    )


def linear_op(x, w, b, *, row_tile=256):
    """y = x @ w + b   (w stored as (in, out), i.e. torch W.T)."""
    n, e_in = x.shape
    e_out = w.shape[1]
    tm = min(row_tile, n)
    n_pad = pl.cdiv(n, tm) * tm
    if n_pad != n:
        x = jnp.pad(x, ((0, n_pad - n), (0, 0)))
    y = pl.pallas_call(
        _linear_kernel,
        out_shape=jax.ShapeDtypeStruct((n_pad, e_out), jnp.float32),
        grid=(n_pad // tm,),
        in_specs=[
            pl.BlockSpec((tm, e_in), lambda i: (i, 0)),
            pl.BlockSpec((e_in, e_out), lambda i: (0, 0)),
            pl.BlockSpec((1, e_out), lambda i: (0, 0)),
        ],
        out_specs=pl.BlockSpec((tm, e_out), lambda i: (i, 0)),
        compiler_params=pltpu.CompilerParams(dimension_semantics=("parallel",)),
    )(x, w, b.reshape(1, e_out))
    return y[:n]


# ----------------------------------------------------------------------------
# Windowed attention kernel
#   grid = (num_windows,)  — each step processes ALL batch*heads for one window
#   inputs per step:
#     q_ref             : (BH, 1, W, Dh)
#     k_refs[0..span-1] : (BH, 1, W, Dh)  overlapping span from the -1-padded K
#     v_refs[0..span-1] : (BH, 1, W, Dh)  overlapping span from the -1-padded V
#   output per step:
#     o_ref             : (B, 1, W, E)    heads folded into the last (lane) dim
# ----------------------------------------------------------------------------

def _window_attn_kernel(*refs, batch, num_heads, window_size, look_backward,
                        look_forward, causal, seq_len, span):
    q_ref = refs[0]
    k_refs = refs[1:1 + span]
    v_refs = refs[1 + span:1 + 2 * span]
    o_ref = refs[1 + 2 * span]

    n = pl.program_id(0)
    w = window_size
    kw = span * w
    dh = q_ref.shape[-1]

    q = q_ref[:, 0]                                                # (BH, W, Dh)
    k = jnp.concatenate([kr[:, 0] for kr in k_refs], axis=1)       # (BH, KW, Dh)
    v = jnp.concatenate([vr[:, 0] for vr in v_refs], axis=1)       # (BH, KW, Dh)

    # scores = q @ k^T  (NO 1/sqrt(d) scaling, matching the PyTorch module)
    scores = jnp.einsum("bwd,bkd->bwk", q, k,
                        preferred_element_type=jnp.float32)        # (BH, W, KW)

    # --- position mask built in-kernel (no tq/tk tensor inputs) -------------
    tq = n * w + jax.lax.broadcasted_iota(jnp.int32, (w, kw), 0)
    tk = (n - look_backward) * w + jax.lax.broadcasted_iota(jnp.int32, (w, kw), 1)
    # "valid" == positions that were NOT -1-padded by collect_windows in the
    # reference; padded positions are intentionally left unmasked (they attend
    # to literal -1 K/V values), exactly as in the PyTorch code.
    valid = (tk >= 0) & (tk < seq_len)
    min_idx = tq - w * look_backward
    if causal:
        # tk > tq is never true for left-pad positions (tk < 0), matching the
        # reference where padded positions carry tk == -1.
        mask = ((tk < min_idx) & valid) | (tk > tq)
    else:
        max_idx = tq + w * look_forward
        mask = ((tk > max_idx) & valid) | ((tk < min_idx) & valid)

    neg = -jnp.finfo(jnp.float32).max
    scores = jnp.where(mask[None, :, :], neg, scores)

    # softmax over keys (f32 throughout)
    m = jnp.max(scores, axis=-1, keepdims=True)
    ex = jnp.exp(scores - m)
    denom = jnp.sum(ex, axis=-1, keepdims=True)
    p = ex * pl.reciprocal(denom, approx=False)

    # TODO(synk): attention dropout (p=0.0 in this config) is a no-op and omitted.
    out = jnp.einsum("bwk,bkd->bwd", p, v,
                     preferred_element_type=jnp.float32)           # (BH, W, Dh)
    out = out.reshape(batch, num_heads, w, dh)

    # Fold heads into the lane dimension of the output block (lane-dense store,
    # and the wrapper needs no head transpose afterwards).
    for h in range(num_heads):
        o_ref[:, 0, :, h * dh:(h + 1) * dh] = out[:, h]


def window_attention_pallas(bq, k_pad, v_pad, *, batch, num_heads, window_size,
                            look_backward, look_forward, causal, seq_len):
    """bq: (BH, NW, W, Dh); k_pad/v_pad: (BH, NW+back+fwd, W, Dh) padded with -1."""
    bh, nw, w, dh = bq.shape
    span = look_backward + look_forward + 1
    e = num_heads * dh

    kernel = functools.partial(
        _window_attn_kernel,
        batch=batch, num_heads=num_heads, window_size=window_size,
        look_backward=look_backward, look_forward=look_forward,
        causal=causal, seq_len=seq_len, span=span,
    )

    def _kv_spec(j):
        # Overlapping window span: step n reads padded windows [n, n+span).
        return pl.BlockSpec((bh, 1, w, dh), lambda n, j=j: (0, n + j, 0, 0))

    return pl.pallas_call(
        kernel,
        out_shape=jax.ShapeDtypeStruct((batch, nw, w, e), jnp.float32),
        grid=(nw,),
        in_specs=([pl.BlockSpec((bh, 1, w, dh), lambda n: (0, n, 0, 0))]
                  + [_kv_spec(j) for j in range(span)]
                  + [_kv_spec(j) for j in range(span)]),
        out_specs=pl.BlockSpec((batch, 1, w, e), lambda n: (0, n, 0, 0)),
        compiler_params=pltpu.CompilerParams(dimension_semantics=("parallel",)),
    )(bq, *([k_pad] * span), *([v_pad] * span))


# ----------------------------------------------------------------------------
# Forward pass (Pallas path)
# ----------------------------------------------------------------------------

def windowed_attention_forward(x, params, *, window_size, causal, look_backward,
                               look_forward, num_heads):
    # TODO(synk): the optional `attention_mask` input of the module is not
    # supported here (it defaults to None in the reference forward).
    look_forward = look_forward if not causal else 0
    b, s, e = x.shape
    dh = e // num_heads
    bh = b * num_heads

    # ---- fused QKV projection: one GEMM, x read from HBM once --------------
    w_qkv = jnp.concatenate([params["wq"], params["wk"], params["wv"]], axis=1)
    b_qkv = jnp.concatenate([params["bq"], params["bk"], params["bv"]])
    qkv = linear_op(x.reshape(b * s, e), w_qkv, b_qkv)              # (B*S, 3E)
    q, k, v = qkv[:, :e], qkv[:, e:2 * e], qkv[:, 2 * e:]

    def split_heads(t):
        return (t.reshape(b, s, num_heads, dh)
                 .transpose(0, 2, 1, 3)
                 .reshape(bh, s, dh))

    q, k, v = split_heads(q), split_heads(k), split_heads(v)

    # pad sequence to a multiple of window_size with zeros (as torch F.pad)
    nw = math.ceil(s / window_size)
    seq_len = nw * window_size
    if seq_len != s:
        pad_cfg = ((0, 0), (0, seq_len - s), (0, 0))
        q = jnp.pad(q, pad_cfg)
        k = jnp.pad(k, pad_cfg)
        v = jnp.pad(v, pad_cfg)

    bq = q.reshape(bh, nw, window_size, dh)
    bk = k.reshape(bh, nw, window_size, dh)
    bv = v.reshape(bh, nw, window_size, dh)

    # Pad the WINDOW axis with the literal value -1 (collect_windows' pad_value);
    # the overlapping spans are fetched straight from these arrays by the
    # BlockSpecs — no 3x-duplicated "collected" K/V copy is materialized.
    pad_w = ((0, 0), (look_backward, look_forward), (0, 0), (0, 0))
    k_pad = jnp.pad(bk, pad_w, constant_values=-1.0)
    v_pad = jnp.pad(bv, pad_w, constant_values=-1.0)

    out = window_attention_pallas(
        bq, k_pad, v_pad,
        batch=b, num_heads=num_heads, window_size=window_size,
        look_backward=look_backward, look_forward=look_forward,
        causal=causal, seq_len=seq_len,
    )                                                     # (B, NW, W, E)

    out = out.reshape(b, seq_len, e)[:, :s]
    out = linear_op(out.reshape(b * s, e), params["wo"], params["bo"])
    return out.reshape(b, s, e)


# ----------------------------------------------------------------------------
# Pure-JAX reference (mirrors the PyTorch forward literally, incl. collect_windows)
# ----------------------------------------------------------------------------

def collect_windows(x, backward, forward, pad_value):
    span = backward + forward + 1
    if x.ndim == 4:
        pad_cfg = ((0, 0), (backward, forward), (0, 0), (0, 0))
    else:
        pad_cfg = ((0, 0), (backward, forward), (0, 0))
    xp = jnp.pad(x, pad_cfg, constant_values=pad_value)
    nw = x.shape[1]
    chunks = []
    for i in range(nw):
        g = xp[:, i:i + span]
        g = g.reshape((g.shape[0], 1, span * x.shape[2]) + tuple(x.shape[3:]))
        chunks.append(g)
    return jnp.concatenate(chunks, axis=1)


def windowed_attention_reference(x, params, *, window_size, causal, look_backward,
                                 look_forward, num_heads):
    look_forward = look_forward if not causal else 0
    b, s, e = x.shape
    dh = e // num_heads
    q = x @ params["wq"] + params["bq"]
    k = x @ params["wk"] + params["bk"]
    v = x @ params["wv"] + params["bv"]

    def split_heads(t):
        return (t.reshape(b, s, num_heads, dh)
                 .transpose(0, 2, 1, 3)
                 .reshape(b * num_heads, s, dh))

    q, k, v = split_heads(q), split_heads(k), split_heads(v)
    if s % window_size != 0:
        diff = window_size * math.ceil(s / window_size) - s
        pad_cfg = ((0, 0), (0, diff), (0, 0))
        q = jnp.pad(q, pad_cfg); k = jnp.pad(k, pad_cfg); v = jnp.pad(v, pad_cfg)
    seq_len = q.shape[1]
    nw = seq_len // window_size
    t = jnp.arange(seq_len, dtype=jnp.int32)
    bt = t.reshape(1, nw, window_size)
    bq = q.reshape(b * num_heads, nw, window_size, dh)
    bk = k.reshape(b * num_heads, nw, window_size, dh)
    bv = v.reshape(b * num_heads, nw, window_size, dh)
    ck = collect_windows(bk, look_backward, look_forward, -1.0)
    cv = collect_windows(bv, look_backward, look_forward, -1.0)
    ct = collect_windows(bt, look_backward, look_forward, -1)
    kw = ck.shape[2]
    tq = bt.reshape(1, nw, window_size, 1)
    tk = ct.reshape(1, nw, 1, kw)
    scores = jnp.einsum("bnwd,bnkd->bnwk", bq, ck)
    valid = tk != -1
    min_idx = tq - window_size * look_backward
    if causal:
        mask = ((tk < min_idx) & valid) | (tk > tq)
    else:
        max_idx = tq + window_size * look_forward
        mask = ((tk > max_idx) & valid) | ((tk < min_idx) & valid)
    neg = -jnp.finfo(jnp.float32).max
    scores = jnp.where(mask, neg, scores)
    p = jax.nn.softmax(scores, axis=-1)
    out = jnp.einsum("bnwk,bnkd->bnwd", p, cv)
    out = out.reshape(b, num_heads, nw * window_size, dh)[:, :, :s]
    out = out.transpose(0, 2, 1, 3).reshape(b, s, e)
    return out @ params["wo"] + params["bo"]


# ----------------------------------------------------------------------------
# Main
# ----------------------------------------------------------------------------

if __name__ == "__main__":
    BATCH = 2
    SEQ = 20            # not a multiple of window_size -> exercises padding path
    EMBED = 32
    HEADS = 4
    WINDOW = 8
    LOOK_BACKWARD = 1
    LOOK_FORWARD = 1

    key = jax.random.PRNGKey(0)
    kx, kq, kk, kv, ko, kbq, kbk, kbv, kbo = jax.random.split(key, 9)
    bound = 1.0 / math.sqrt(EMBED)   # nn.Linear default init range

    def init_w(k_):
        return jax.random.uniform(k_, (EMBED, EMBED), jnp.float32, -bound, bound)

    def init_b(k_):
        return jax.random.uniform(k_, (EMBED,), jnp.float32, -bound, bound)

    params = {
        "wq": init_w(kq), "bq": init_b(kbq),
        "wk": init_w(kk), "bk": init_b(kbk),
        "wv": init_w(kv), "bv": init_b(kbv),
        "wo": init_w(ko), "bo": init_b(kbo),
    }
    x = jax.random.normal(kx, (BATCH, SEQ, EMBED), jnp.float32)

    ok = True
    for causal in (False, True):
        cfg = dict(window_size=WINDOW, causal=causal,
                   look_backward=LOOK_BACKWARD, look_forward=LOOK_FORWARD,
                   num_heads=HEADS)
        out_pallas = jax.block_until_ready(windowed_attention_forward(x, params, **cfg))
        out_ref = jax.block_until_ready(windowed_attention_reference(x, params, **cfg))
        assert out_pallas.shape == (BATCH, SEQ, EMBED)
        err = float(jnp.max(jnp.abs(out_pallas - out_ref)))
        ok = ok and bool(jnp.allclose(out_pallas, out_ref, atol=5e-4, rtol=5e-4))
        assert ok, f"causal={causal} max_abs_err={err}"

    print("KERNEL_OK")
</pallas_src>

<mosaic_0001>
module attributes {stable_mosaic.version = 11 : i64} {
  func.func @_linear_kernel(%arg0: i32, %arg1: memref<40x32xf32, #tpu.memory_space<vmem>>, %arg2: memref<32x96xf32, #tpu.memory_space<vmem>>, %arg3: memref<1x96xf32, #tpu.memory_space<vmem>>, %arg4: memref<40x96xf32, #tpu.memory_space<vmem>>) attributes {dimension_semantics = [#tpu.dimension_semantics<parallel>], iteration_bounds = array<i64: 1>, scalar_prefetch = 0 : i64, scratch_operands = 0 : i64, tpu.core_type = #tpu.core_type<tc>, window_params = [{transform_indices = @transform_0, window_bounds = array<i64: 40, 32>}, {pipeline_mode = #tpu.pipeline_mode<synchronous>, transform_indices = @transform_1, window_bounds = array<i64: 32, 96>}, {pipeline_mode = #tpu.pipeline_mode<synchronous>, transform_indices = @transform_2, window_bounds = array<i64: 1, 96>}, {transform_indices = @transform_3, window_bounds = array<i64: 40, 96>}]} {
    %c0 = arith.constant 0 : index
    %c0_0 = arith.constant 0 : index
    %0 = vector.load %arg1[%c0, %c0_0] : memref<40x32xf32, #tpu.memory_space<vmem>>, vector<40x32xf32>
    %c0_1 = arith.constant 0 : index
    %c0_2 = arith.constant 0 : index
    %1 = vector.load %arg2[%c0_1, %c0_2] : memref<32x96xf32, #tpu.memory_space<vmem>>, vector<32x96xf32>
    %cst = arith.constant dense<0.000000e+00> : vector<40x96xf32>
    %2 = tpu.matmul %0, %1, %cst {dimension_numbers = #tpu.dot_dimension_numbers<[1], [0], [0], [1], [0, 0, 1, 1], [], []>} : vector<40x32xf32>, vector<32x96xf32>, vector<40x96xf32> -> vector<40x96xf32>
    %c0_3 = arith.constant 0 : index
    %c0_4 = arith.constant 0 : index
    %3 = vector.load %arg3[%c0_3, %c0_4] : memref<1x96xf32, #tpu.memory_space<vmem>>, vector<1x96xf32>
    %4 = vector.broadcast %3 : vector<1x96xf32> to vector<40x96xf32>
    %5 = arith.addf %2, %4 : vector<40x96xf32>
    %c0_5 = arith.constant 0 : index
    %c0_6 = arith.constant 0 : index
    %6 = vector.load %arg4[%c0_5, %c0_6] : memref<40x96xf32, #tpu.memory_space<vmem>>, vector<40x96xf32>
    tpu.vector_store %arg4[%c0_5, %c0_6], %5 {strides = array<i32>} : memref<40x96xf32, #tpu.memory_space<vmem>>, vector<40x96xf32>,
    return
  }
  func.func @transform_0(%arg0: i32) -> (i32, i32) {
    %c0_i32 = arith.constant 0 : i32
    %c0_i32_0 = arith.constant 0 : i32
    return %arg0, %c0_i32 : i32, i32
  }
  func.func @transform_1(%arg0: i32) -> (i32, i32) {
    %c0_i32 = arith.constant 0 : i32
    %c0_i32_0 = arith.constant 0 : i32
    %c0_i32_1 = arith.constant 0 : i32
    return %c0_i32, %c0_i32_0 : i32, i32
  }
  func.func @transform_2(%arg0: i32) -> (i32, i32) {
    %c0_i32 = arith.constant 0 : i32
    %c0_i32_0 = arith.constant 0 : i32
    %c0_i32_1 = arith.constant 0 : i32
    return %c0_i32, %c0_i32_0 : i32, i32
  }
  func.func @transform_3(%arg0: i32) -> (i32, i32) {
    %c0_i32 = arith.constant 0 : i32
    %c0_i32_0 = arith.constant 0 : i32
    return %arg0, %c0_i32 : i32, i32
  }
}

</mosaic_0001>

<llo_original>
// kernel: tpu_custom_call.1
$region0: #{tpu_custom_call.1}
  #allocation0 [shape = 'u32[]', space=smem, size = 0x4, offset = 0x4, fixed_abs, tag = 'smem constant byte address 0x4 - core index']
  #allocation1 [shape = 'u32[144,128]{1,0:T(1,128)}', space=vmem, size = 0x12000, scoped, tag = 'internal scratch']
  %s0 = inlined_call_operand.vmem [shape: f32[40,32], index: 0, kind: input, shape index: {}]
  %s1 = inlined_call_operand.vmem [shape: f32[32,96], index: 1, kind: input, shape index: {}]
  %s2 = inlined_call_operand.vmem [shape: f32[1,96], index: 2, kind: input, shape index: {}]
  %s3 = inlined_call_operand.hbm [shape: f32[40,96], index: 3, kind: output, shape index: {}]
  %s4 = sld [smem:[#allocation0]]
  $region22: #{tpu_custom_call.1} parent=0
    _
  %s6 = ssub.s32 1, %s4
  %s7 = scalar_select 0, %s6, %s4
  $region1: #{tpu_custom_call.1} parent=0
    #allocation2 [shape = 'u8[20480]{0}', space=vmem, size = 0x5000, scoped, tag = 'output window, operand 0, single buffered']
    #allocation3 [shape = 's32[1]{0}', space=sflag, size = 0x4, scoped, tag = 'scoped memory for tpu_custom_call.1']
    %8 = vsyncpa [#allocation3], 0
    // Predicated region
    $region2: #{tpu_custom_call.1} parent=1 // pred_check
      _
    $region3: #{tpu_custom_call.1} parent=1 // pred_check_branch
      %10 = sbr.rel (0) target = $region5
    $region4: #{tpu_custom_call.1} parent=1 // pred_region
      _
    $region5: #{tpu_custom_call.1} parent=1 // pred_fallthru
      _
    // Predicated region
    $region6: #{tpu_custom_call.1} parent=1 // pred_check
      _
    $region7: #{tpu_custom_call.1} parent=1 // pred_check_branch
      %12 = sbr.rel (0) target = $region9
    $region8: #{tpu_custom_call.1} parent=1 // pred_region
      _
    $region9: #{tpu_custom_call.1} parent=1 // pred_fallthru
      _
    // Predicated region
    $region10: #{tpu_custom_call.1} parent=1 // pred_check
      _
    $region11: #{tpu_custom_call.1} parent=1 // pred_check_branch
      %14 = sbr.rel (0) target = $region13
    $region12: #{tpu_custom_call.1} parent=1 // pred_region
      _
    $region13: #{tpu_custom_call.1} parent=1 // pred_fallthru
      _
    %v15 = vld [vmem:[%s0] sm:$0xff]
    %v16 = vld [vmem:[%s0 + $0x8] sm:$0xff]
    %v17 = vld [vmem:[%s0 + $0x10] sm:$0xff]
    %v18 = vld [vmem:[%s0 + $0x18] sm:$0xff]
    %v19 = vld [vmem:[%s0 + $0x20] sm:$0xff]
    %v20 = vld [vmem:[%s1] sm:$0xff]
    %v21 = vld [vmem:[%s1 + $0x8] sm:$0xff]
    %v22 = vld [vmem:[%s1 + $0x10] sm:$0xff]
    %v23 = vld [vmem:[%s1 + $0x18] sm:$0xff]
    %v24 = vld [vmem:[%s2] sm:$0x1]
    %v26 = vlaneseq
    %v27 = vshrl.u32 %v26, 7
    %v28 = vsub.s32 0, %v27
    %v29 = vrot.slane %v24, %v28
    %vm31 = vcmask 261120
    %v33 = vsel %vm31, %v15, 0
    %v36 = vsel %vm31, %v16, 0
    %v39 = vsel %vm31, %v17, 0
    %v42 = vsel %vm31, %v18, 0
    %v45 = vsel %vm31, %v19, 0
    %47 = vmatprep.subr.mxu0 0.0
    %48 = vmatpush1.msra.mxu0 %v20
    %49 = vmatprep.subr.mxu0 0.0
    %50 = vmatpush1.msra.mxu0 %v21
    %51 = vmatprep.subr.mxu0 0.0
    %52 = vmatpush1.msra.mxu0 %v22
    %53 = vmatprep.subr.mxu0 0.0
    %54 = vmatpush1.msra.mxu0 %v23
    %55 = vmatprep.subr.mxu0 0.0
    %56 = vmatpush1.msra.mxu0 0.0
    %57 = vmatprep.subr.mxu0 0.0
    %58 = vmatpush1.msra.mxu0 0.0
    %59 = vmatprep.subr.mxu0 0.0
    %60 = vmatpush1.msra.mxu0 0.0
    %61 = vmatprep.subr.mxu0 0.0
    %62 = vmatpush1.msra.mxu0 0.0
    %63 = vmatprep.subr.mxu0 0.0
    %64 = vmatpush1.msra.mxu0 0.0
    %65 = vmatprep.subr.mxu0 0.0
    %66 = vmatpush1.msra.mxu0 0.0
    %67 = vmatprep.subr.mxu0 0.0
    %68 = vmatpush1.msra.mxu0 0.0
    %69 = vmatprep.subr.mxu0 0.0
    %70 = vmatpush1.msra.mxu0 0.0
    %71 = vmatprep.subr.mxu0 0.0
    %72 = vmatpush1.msra.mxu0 0.0
    %73 = vmatprep.subr.mxu0 0.0
    %74 = vmatpush1.msra.mxu0 0.0
    %75 = vmatprep.subr.mxu0 0.0
    %76 = vmatpush1.msra.mxu0 0.0
    %77 = vmatprep.subr.mxu0 0.0
    %78 = vmatpush1.msra.mxu0 0.0
    %79 = vmatprep.subr.mxu0 0.0
    %80 = vmatpush1.msra.mxu0 0.0
    %81 = vmatprep.subr.mxu0 0.0
    %82 = vmatpush1.msra.mxu0 0.0
    %83 = vmatprep.subr.mxu0 0.0
    %84 = vmatpush1.msra.mxu0 0.0
    %85 = vmatprep.subr.mxu0 0.0
    %86 = vmatpush1.msra.mxu0 0.0
    %87 = vmatprep.subr.mxu0 0.0
    %88 = vmatpush1.msra.mxu0 0.0
    %89 = vmatprep.subr.mxu0 0.0
    %90 = vmatpush1.msra.mxu0 0.0
    %91 = vmatprep.subr.mxu0 0.0
    %92 = vmatpush1.msra.mxu0 0.0
    %93 = vmatprep.subr.mxu0 0.0
    %94 = vmatpush1.msra.mxu0 0.0
    %95 = vmatprep.subr.mxu0 0.0
    %96 = vmatpush1.msra.mxu0 0.0
    %97 = vmatprep.subr.mxu0 0.0
    %98 = vmatpush1.msra.mxu0 0.0
    %99 = vmatprep.subr.mxu0 0.0
    %100 = vmatpush1.msra.mxu0 0.0
    %101 = vmatprep.subr.mxu0 0.0
    %102 = vmatpush1.msra.mxu0 0.0
    %103 = vmatprep.subr.mxu0 0.0
    %104 = vmatpush1.msra.mxu0 0.0
    %105 = vmatprep.subr.mxu0 0.0
    %106 = vmatpush1.msra.mxu0 0.0
    %107 = vmatprep.subr.mxu0 0.0
    %108 = vmatpush1.msra.mxu0 0.0
    %109 = vmatprep.subr.mxu0 0.0
    %110 = vmatpush1.msra.mxu0 0.0
    %111 = vmatprep.mubr.f32.mxu0 0.0
    %112 = vmatmul.mubr.f32.gmra.mrb[0].mxu0 %v33
    %v113 = vpop.f32.mrb[0].mxu0
    %v114 = vadd.f32 %v29, %v113
    %v115 = vpop.f32.mrb[0].mxu0
    %116 = vmatprep.mubr.f32.mxu0 0.0
    %117 = vmatmul.mubr.f32.gmra.mrb[0].mxu0 %v36
    %v118 = vpop.f32.mrb[0].mxu0
    %v119 = vadd.f32 %v29, %v118
    %v120 = vpop.f32.mrb[0].mxu0
    %121 = vmatprep.mubr.f32.mxu0 0.0
    %122 = vmatmul.mubr.f32.gmra.mrb[0].mxu0 %v39
    %v123 = vpop.f32.mrb[0].mxu0
    %v124 = vadd.f32 %v29, %v123
    %v125 = vpop.f32.mrb[0].mxu0
    %126 = vmatprep.mubr.f32.mxu0 0.0
    %127 = vmatmul.mubr.f32.gmra.mrb[0].mxu0 %v42
    %v128 = vpop.f32.mrb[0].mxu0
    %v129 = vadd.f32 %v29, %v128
    %v130 = vpop.f32.mrb[0].mxu0
    %131 = vmatprep.mubr.f32.mxu0 0.0
    %132 = vmatmul.mubr.f32.gmra.mrb[0].mxu0 %v45
    %v133 = vpop.f32.mrb[0].mxu0
    %v134 = vadd.f32 %v29, %v133
    %v135 = vpop.f32.mrb[0].mxu0
    %136 = vdwg.mxu0
    %vm137 = vcmask 785408
    %138 = vst.msk [vmem:[#allocation2] sm:$0xff] %vm137, %v114
    %139 = vst.msk [vmem:[#allocation2 + $0x8] sm:$0xff] %vm137, %v119
    %140 = vst.msk [vmem:[#allocation2 + $0x10] sm:$0xff] %vm137, %v124
    %141 = vst.msk [vmem:[#allocation2 + $0x18] sm:$0xff] %vm137, %v129
    %142 = vst.msk [vmem:[#allocation2 + $0x20] sm:$0xff] %vm137, %v134
    // Predicated region
    $region14: #{tpu_custom_call.1} parent=1 // pred_check
      _
    $region15: #{tpu_custom_call.1} parent=1 // pred_check_branch
      %144 = sbr.rel (0) target = $region17
    $region16: #{tpu_custom_call.1} parent=1 // pred_region
      %s146 = ssub.s32 640, 640
      %147 = vsyncadd [#allocation3], %s146
      %s148 = sshll.u32 [#allocation2], 4
      %s149 = int_to_ptr.vmem [resolvable:$true] %s148
      %154 = dma.vmem_to_hbm [thread:$0]  %s149, 640, %s3, [#allocation3], 128, 128, 8
    $region17: #{tpu_custom_call.1} parent=1 // pred_fallthru
      _
    // Predicated region
    $region18: #{tpu_custom_call.1} parent=1 // pred_check
      _
    $region19: #{tpu_custom_call.1} parent=1 // pred_check_branch
      %156 = sbr.rel (0) target = $region21
    $region20: #{tpu_custom_call.1} parent=1 // pred_region
      %157 = dma.done [#allocation3], 640
    $region21: #{tpu_custom_call.1} parent=1 // pred_fallthru
      _
    %158 = vsyncpa [#allocation3], 1

</llo_original>
